<compile_context>
chip_gen: v5e
topology: v5e:2x2
jax: 0.10.0
libtpu: 0.0.40
codegen_flags: <defaults>
</compile_context>

<pallas_src>
import jax
import jax.numpy as jnp
from jax.experimental import pallas as pl
from jax.experimental.pallas import tpu as pltpu

# ---- module hyper-parameters (synthetic small CLIP) ----
N_ID = 8          # number of identities (rows in learned ctx table)
N_CTX = 4         # learned context tokens
N_PREFIX = 5      # "SOS A photo of a" -> n_ctx_prefix + 1
SEQ_LEN = 77      # CLIP tokenized length
N_SUFFIX = SEQ_LEN - N_PREFIX - N_CTX   # 68
CTX_DIM = 64      # ln_final width (ctx_dim)
VIS_DIM = 64      # visual.output_dim
HID_DIM = VIS_DIM // 16                 # meta_net bottleneck = 4
DTYPE = jnp.float32                     # keep f32; switch output to bf16 if the
                                        # downstream text encoder accepts it.

CTX_FLAT = N_CTX * CTX_DIM              # 256 (lane-aligned: 2 x 128)


def prompt_learner_kernel(lbl_ref,          # (bb, 1) int32 labels
                          imf_ref,          # (bb, VIS_DIM) image features
                          ctx_tbl_ref,      # (N_ID, CTX_FLAT) learned ctx table (flattened)
                          w1_ref, b1_ref,   # (VIS_DIM, HID_DIM), (1, HID_DIM)
                          w2_ref, b2_ref,   # (HID_DIM, CTX_FLAT), (1, CTX_FLAT)  (pre-tiled)
                          out_ref):         # (bb, CTX_FLAT)  ctx_shifted slab only
    bb = out_ref.shape[0]

    # ---- meta_net: Linear -> ReLU -> Linear (w2 pre-tiled per token), MXU ----
    x = imf_ref[...]                                                            # (bb, VIS_DIM)
    h = jnp.dot(x, w1_ref[...], preferred_element_type=jnp.float32) + b1_ref[...]
    h = jnp.maximum(h, 0.0)                                                     # (bb, HID_DIM)
    bias = jnp.dot(h, w2_ref[...], preferred_element_type=jnp.float32) + b2_ref[...]  # (bb, CTX_FLAT)

    # ---- ctx gather as a one-hot MXU matmul over the small, VMEM-resident table ----
    lbl = lbl_ref[...]                                                          # (bb, 1) int32
    ids = jax.lax.broadcasted_iota(jnp.int32, (bb, N_ID), 1)                    # (bb, N_ID)
    onehot = (lbl == ids).astype(jnp.float32)                                   # (bb, N_ID)
    ctx_rows = jnp.dot(onehot, ctx_tbl_ref[...],
                       preferred_element_type=jnp.float32)                      # (bb, CTX_FLAT)

    # ---- single, lane-aligned full-block store of the only data-dependent region ----
    out_ref[...] = (ctx_rows + bias).astype(out_ref.dtype)


def make_prompt_template(params, b, dtype=DTYPE):
    """Constant prompt buffer with prefix/suffix prefilled and ctx region zero.

    A production caller should build this once per batch size and donate it to a
    jitted forward so the constant tokens are never rewritten to HBM.
    """
    prefix = jnp.broadcast_to(params["prefix"], (b, N_PREFIX, CTX_DIM)).astype(dtype)
    suffix = jnp.broadcast_to(params["suffix"], (b, N_SUFFIX, CTX_DIM)).astype(dtype)
    ctx0 = jnp.zeros((b, N_CTX, CTX_DIM), dtype)
    return jnp.concatenate([prefix, ctx0, suffix], axis=1)


def prompt_learner_forward(label, image_features, params, block_b=512, template=None):
    """label: (B,) int32, image_features: (B, VIS_DIM) -> prompts (B, SEQ_LEN, CTX_DIM).

    block_b: max samples per grid step. The kernel output block is only
    (bb, 256) f32, so VMEM is never a constraint on v5e/v6e/v7x at these sizes.
    template: optional caller-managed (B, SEQ_LEN, CTX_DIM) constant buffer
    (from make_prompt_template); when donated under jit, only the ctx slab is
    written back to HBM per step.
    """
    b = label.shape[0]
    n_blocks = pl.cdiv(b, block_b)
    if n_blocks == 1 and b >= 16:
        n_blocks = 2                              # let megacore use both TCs on v7x
    bb = ((pl.cdiv(b, n_blocks) + 7) // 8) * 8    # minimal multiple of 8 -> little tail waste
    b_pad = n_blocks * bb

    lbl = label.astype(jnp.int32).reshape(b, 1)
    imf = image_features.astype(DTYPE)
    if b_pad != b:
        lbl = jnp.pad(lbl, ((0, b_pad - b), (0, 0)))   # padded labels -> id 0 (in range)
        imf = jnp.pad(imf, ((0, b_pad - b), (0, 0)))

    # Fold the token axis into the lane axis; pre-tile w2/b2 so the second matmul
    # already produces the per-token-replicated bias (matches row-major ctx flatten).
    ctx_tbl = params["ctx"].reshape(N_ID, CTX_FLAT)
    w2_tiled = jnp.tile(params["w2"], (1, N_CTX))      # (HID_DIM, CTX_FLAT)
    b2_tiled = jnp.tile(params["b2"], (1, N_CTX))      # (1, CTX_FLAT)

    grid_spec = pltpu.PrefetchScalarGridSpec(
        num_scalar_prefetch=0,
        grid=(n_blocks,),
        in_specs=[
            pl.BlockSpec((bb, 1), lambda i: (i, 0)),                 # labels
            pl.BlockSpec((bb, VIS_DIM), lambda i: (i, 0)),           # image features
            pl.BlockSpec((N_ID, CTX_FLAT), lambda i: (0, 0)),        # ctx table (resident)
            pl.BlockSpec((VIS_DIM, HID_DIM), lambda i: (0, 0)),      # w1
            pl.BlockSpec((1, HID_DIM), lambda i: (0, 0)),            # b1
            pl.BlockSpec((HID_DIM, CTX_FLAT), lambda i: (0, 0)),     # w2 (tiled)
            pl.BlockSpec((1, CTX_FLAT), lambda i: (0, 0)),           # b2 (tiled)
        ],
        out_specs=pl.BlockSpec((bb, CTX_FLAT), lambda i: (i, 0)),
    )

    flops = 2 * b_pad * (VIS_DIM * HID_DIM + HID_DIM * CTX_FLAT + N_ID * CTX_FLAT)
    bytes_accessed = 4 * (b_pad * (1 + VIS_DIM + CTX_FLAT)
                          + N_ID * CTX_FLAT + VIS_DIM * HID_DIM + HID_DIM
                          + HID_DIM * CTX_FLAT + CTX_FLAT)

    ctx_flat = pl.pallas_call(
        prompt_learner_kernel,
        out_shape=jax.ShapeDtypeStruct((b_pad, CTX_FLAT), DTYPE),
        grid_spec=grid_spec,
        compiler_params=pltpu.CompilerParams(
            dimension_semantics=("parallel",)),      # independent batch blocks
        cost_estimate=pl.CostEstimate(flops=flops, transcendentals=0,
                                      bytes_accessed=bytes_accessed),
    )(lbl, imf, ctx_tbl, params["w1"], params["b1"], w2_tiled, b2_tiled)

    ctx_shifted = ctx_flat[:b].reshape(b, N_CTX, CTX_DIM)

    if template is not None:
        # In-place ctx update of the caller's persistent template (XLA keeps it
        # in-place when the template buffer is donated under jit).
        return jax.lax.dynamic_update_slice(
            template, ctx_shifted.astype(template.dtype), (0, N_PREFIX, 0))

    # Default path: XLA assembles [prefix | ctx_shifted | suffix] in one pass.
    # TODO(synk): for repeated fixed-B inference, prefer the donated-template path
    # above so the constant prefix/suffix tokens are never rewritten to HBM.
    prefix = jnp.broadcast_to(params["prefix"], (b, N_PREFIX, CTX_DIM)).astype(DTYPE)
    suffix = jnp.broadcast_to(params["suffix"], (b, N_SUFFIX, CTX_DIM)).astype(DTYPE)
    return jnp.concatenate([prefix, ctx_shifted, suffix], axis=1)


def prompt_learner_reference(label, image_features, params):
    b = label.shape[0]
    ctx = params["ctx"][label]                                        # (b, N_CTX, D)
    h = jnp.maximum(image_features @ params["w1"] + params["b1"], 0.0)
    bias = h @ params["w2"] + params["b2"]                            # (b, D)
    ctx_shifted = ctx + bias[:, None, :]
    prefix = jnp.broadcast_to(params["prefix"], (b, N_PREFIX, CTX_DIM))
    suffix = jnp.broadcast_to(params["suffix"], (b, N_SUFFIX, CTX_DIM))
    return jnp.concatenate([prefix, ctx_shifted, suffix], axis=1)


def init_params(key):
    k_ctx, k_w1, k_b1, k_w2, k_b2, k_pre, k_suf = jax.random.split(key, 7)
    bound1 = 1.0 / (VIS_DIM ** 0.5)
    bound2 = 1.0 / (HID_DIM ** 0.5)
    return {
        # nn.init.normal_(ctx_vectors, std=0.02)
        "ctx": (0.02 * jax.random.normal(k_ctx, (N_ID, N_CTX, CTX_DIM))).astype(DTYPE),
        # meta_net Linear params (PyTorch default uniform init, deterministic here)
        "w1": jax.random.uniform(k_w1, (VIS_DIM, HID_DIM), minval=-bound1, maxval=bound1).astype(DTYPE),
        "b1": jax.random.uniform(k_b1, (1, HID_DIM), minval=-bound1, maxval=bound1).astype(DTYPE),
        "w2": jax.random.uniform(k_w2, (HID_DIM, CTX_DIM), minval=-bound2, maxval=bound2).astype(DTYPE),
        "b2": jax.random.uniform(k_b2, (1, CTX_DIM), minval=-bound2, maxval=bound2).astype(DTYPE),
        # frozen buffers from clip_model.token_embedding(tokenized_prompts)
        # TODO(synk): no CLIP tokenizer/embedding in-script; buffers are deterministic random stand-ins.
        "prefix": jax.random.normal(k_pre, (1, N_PREFIX, CTX_DIM)).astype(DTYPE),
        "suffix": jax.random.normal(k_suf, (1, N_SUFFIX, CTX_DIM)).astype(DTYPE),
    }


if __name__ == "__main__":
    key = jax.random.PRNGKey(0)
    params = init_params(key)

    k_lbl, k_imf = jax.random.split(jax.random.PRNGKey(1))
    B = 2
    label = jax.random.randint(k_lbl, (B,), 0, N_ID, dtype=jnp.int32)
    image_features = jax.random.normal(k_imf, (B, VIS_DIM), dtype=DTYPE)

    ref = prompt_learner_reference(label, image_features, params)

    # default path (kernel writes only the ctx slab; XLA assembles the rest)
    prompts = prompt_learner_forward(label, image_features, params)
    prompts = jax.block_until_ready(prompts)
    assert prompts.shape == (B, SEQ_LEN, CTX_DIM), prompts.shape
    assert jnp.allclose(prompts, ref, atol=1e-5, rtol=1e-5), "mismatch vs JAX reference"

    # caller-managed persistent-template path (in-place ctx update when donated)
    template = make_prompt_template(params, B)
    prompts_t = prompt_learner_forward(label, image_features, params, template=template)
    prompts_t = jax.block_until_ready(prompts_t)
    assert jnp.allclose(prompts_t, ref, atol=1e-5, rtol=1e-5), "template-path mismatch"

    print("KERNEL_OK")
</pallas_src>

<mosaic_0001>
module attributes {stable_mosaic.version = 11 : i64} {
  func.func @prompt_learner_kernel(%arg0: i32, %arg1: memref<8x1xi32, #tpu.memory_space<vmem>>, %arg2: memref<8x64xf32, #tpu.memory_space<vmem>>, %arg3: memref<8x256xf32, #tpu.memory_space<vmem>>, %arg4: memref<64x4xf32, #tpu.memory_space<vmem>>, %arg5: memref<1x4xf32, #tpu.memory_space<vmem>>, %arg6: memref<4x256xf32, #tpu.memory_space<vmem>>, %arg7: memref<1x256xf32, #tpu.memory_space<vmem>>, %arg8: memref<8x256xf32, #tpu.memory_space<vmem>>) attributes {dimension_semantics = [#tpu.dimension_semantics<parallel>], iteration_bounds = array<i64: 1>, scalar_prefetch = 0 : i64, scratch_operands = 0 : i64, tpu.core_type = #tpu.core_type<tc>, window_params = [{transform_indices = @transform_0, window_bounds = array<i64: 8, 1>}, {transform_indices = @transform_1, window_bounds = array<i64: 8, 64>}, {pipeline_mode = #tpu.pipeline_mode<synchronous>, transform_indices = @transform_2, window_bounds = array<i64: 8, 256>}, {pipeline_mode = #tpu.pipeline_mode<synchronous>, transform_indices = @transform_3, window_bounds = array<i64: 64, 4>}, {pipeline_mode = #tpu.pipeline_mode<synchronous>, transform_indices = @transform_4, window_bounds = array<i64: 1, 4>}, {pipeline_mode = #tpu.pipeline_mode<synchronous>, transform_indices = @transform_5, window_bounds = array<i64: 4, 256>}, {pipeline_mode = #tpu.pipeline_mode<synchronous>, transform_indices = @transform_6, window_bounds = array<i64: 1, 256>}, {transform_indices = @transform_7, window_bounds = array<i64: 8, 256>}]} {
    %c0 = arith.constant 0 : index
    %c0_0 = arith.constant 0 : index
    %0 = vector.load %arg2[%c0, %c0_0] : memref<8x64xf32, #tpu.memory_space<vmem>>, vector<8x64xf32>
    %c0_1 = arith.constant 0 : index
    %c0_2 = arith.constant 0 : index
    %1 = vector.load %arg4[%c0_1, %c0_2] : memref<64x4xf32, #tpu.memory_space<vmem>>, vector<64x4xf32>
    %cst = arith.constant dense<0.000000e+00> : vector<8x4xf32>
    %2 = tpu.matmul %0, %1, %cst {dimension_numbers = #tpu.dot_dimension_numbers<[1], [0], [0], [1], [0, 0, 1, 1], [], []>} : vector<8x64xf32>, vector<64x4xf32>, vector<8x4xf32> -> vector<8x4xf32>
    %c0_3 = arith.constant 0 : index
    %c0_4 = arith.constant 0 : index
    %3 = vector.load %arg5[%c0_3, %c0_4] : memref<1x4xf32, #tpu.memory_space<vmem>>, vector<1x4xf32>
    %4 = vector.broadcast %3 : vector<1x4xf32> to vector<8x4xf32>
    %5 = arith.addf %2, %4 : vector<8x4xf32>
    %cst_5 = arith.constant 0.000000e+00 : f32
    %6 = vector.broadcast %cst_5 : f32 to vector<8x4xf32>
    %7 = arith.maximumf %5, %6 : vector<8x4xf32>
    %c0_6 = arith.constant 0 : index
    %c0_7 = arith.constant 0 : index
    %8 = vector.load %arg6[%c0_6, %c0_7] : memref<4x256xf32, #tpu.memory_space<vmem>>, vector<4x256xf32>
    %cst_8 = arith.constant dense<0.000000e+00> : vector<8x256xf32>
    %9 = tpu.matmul %7, %8, %cst_8 {dimension_numbers = #tpu.dot_dimension_numbers<[1], [0], [0], [1], [0, 0, 1, 1], [], []>} : vector<8x4xf32>, vector<4x256xf32>, vector<8x256xf32> -> vector<8x256xf32>
    %c0_9 = arith.constant 0 : index
    %c0_10 = arith.constant 0 : index
    %10 = vector.load %arg7[%c0_9, %c0_10] : memref<1x256xf32, #tpu.memory_space<vmem>>, vector<1x256xf32>
    %11 = vector.broadcast %10 : vector<1x256xf32> to vector<8x256xf32>
    %12 = arith.addf %9, %11 : vector<8x256xf32>
    %c0_11 = arith.constant 0 : index
    %c0_12 = arith.constant 0 : index
    %13 = vector.load %arg1[%c0_11, %c0_12] : memref<8x1xi32, #tpu.memory_space<vmem>>, vector<8x1xi32>
    %14 = tpu.iota {dimensions = array<i32: 1>} : vector<8x8xi32>
    %15 = vector.broadcast %13 : vector<8x1xi32> to vector<8x8xi32>
    %16 = arith.cmpi eq, %15, %14 : vector<8x8xi32>
    %17 = arith.extui %16 : vector<8x8xi1> to vector<8x8xi32>
    %18 = arith.sitofp %17 : vector<8x8xi32> to vector<8x8xf32>
    %c0_13 = arith.constant 0 : index
    %c0_14 = arith.constant 0 : index
    %19 = vector.load %arg3[%c0_13, %c0_14] : memref<8x256xf32, #tpu.memory_space<vmem>>, vector<8x256xf32>
    %cst_15 = arith.constant dense<0.000000e+00> : vector<8x256xf32>
    %20 = tpu.matmul %18, %19, %cst_15 {dimension_numbers = #tpu.dot_dimension_numbers<[1], [0], [0], [1], [0, 0, 1, 1], [], []>} : vector<8x8xf32>, vector<8x256xf32>, vector<8x256xf32> -> vector<8x256xf32>
    %21 = arith.addf %20, %12 : vector<8x256xf32>
    %c0_16 = arith.constant 0 : index
    %c0_17 = arith.constant 0 : index
    %22 = vector.load %arg8[%c0_16, %c0_17] : memref<8x256xf32, #tpu.memory_space<vmem>>, vector<8x256xf32>
    tpu.vector_store %arg8[%c0_16, %c0_17], %21 {strides = array<i32>} : memref<8x256xf32, #tpu.memory_space<vmem>>, vector<8x256xf32>,
    return
  }
  func.func @transform_0(%arg0: i32) -> (i32, i32) {
    %c0_i32 = arith.constant 0 : i32
    %c0_i32_0 = arith.constant 0 : i32
    return %arg0, %c0_i32 : i32, i32
  }
  func.func @transform_1(%arg0: i32) -> (i32, i32) {
    %c0_i32 = arith.constant 0 : i32
    %c0_i32_0 = arith.constant 0 : i32
    return %arg0, %c0_i32 : i32, i32
  }
  func.func @transform_2(%arg0: i32) -> (i32, i32) {
    %c0_i32 = arith.constant 0 : i32
    %c0_i32_0 = arith.constant 0 : i32
    %c0_i32_1 = arith.constant 0 : i32
    return %c0_i32, %c0_i32_0 : i32, i32
  }
  func.func @transform_3(%arg0: i32) -> (i32, i32) {
    %c0_i32 = arith.constant 0 : i32
    %c0_i32_0 = arith.constant 0 : i32
    %c0_i32_1 = arith.constant 0 : i32
    return %c0_i32, %c0_i32_0 : i32, i32
  }
  func.func @transform_4(%arg0: i32) -> (i32, i32) {
    %c0_i32 = arith.constant 0 : i32
    %c0_i32_0 = arith.constant 0 : i32
    %c0_i32_1 = arith.constant 0 : i32
    return %c0_i32, %c0_i32_0 : i32, i32
  }
  func.func @transform_5(%arg0: i32) -> (i32, i32) {
    %c0_i32 = arith.constant 0 : i32
    %c0_i32_0 = arith.constant 0 : i32
    %c0_i32_1 = arith.constant 0 : i32
    return %c0_i32, %c0_i32_0 : i32, i32
  }
  func.func @transform_6(%arg0: i32) -> (i32, i32) {
    %c0_i32 = arith.constant 0 : i32
    %c0_i32_0 = arith.constant 0 : i32
    %c0_i32_1 = arith.constant 0 : i32
    return %c0_i32, %c0_i32_0 : i32, i32
  }
  func.func @transform_7(%arg0: i32) -> (i32, i32) {
    %c0_i32 = arith.constant 0 : i32
    %c0_i32_0 = arith.constant 0 : i32
    return %arg0, %c0_i32 : i32, i32
  }
}

</mosaic_0001>

<llo_original>
// kernel: tpu_custom_call.1
$region0: #{tpu_custom_call.1}
  #allocation0 [shape = 'u32[]', space=smem, size = 0x4, offset = 0x4, fixed_abs, tag = 'smem constant byte address 0x4 - core index']
  #allocation1 [shape = 'u32[72,128]{1,0:T(1,128)}', space=vmem, size = 0x9000, scoped, tag = 'internal scratch']
  %s0 = inlined_call_operand.vmem [shape: s32[8,1], index: 0, kind: input, shape index: {}]
  %s1 = inlined_call_operand.vmem [shape: f32[8,64], index: 1, kind: input, shape index: {}]
  %s2 = inlined_call_operand.vmem [shape: f32[8,256], index: 2, kind: input, shape index: {}]
  %s3 = inlined_call_operand.vmem [shape: f32[64,4], index: 3, kind: input, shape index: {}]
  %s4 = inlined_call_operand.vmem [shape: f32[1,4], index: 4, kind: input, shape index: {}]
  %s5 = inlined_call_operand.vmem [shape: f32[4,256], index: 5, kind: input, shape index: {}]
  %s6 = inlined_call_operand.vmem [shape: f32[1,256], index: 6, kind: input, shape index: {}]
  %s7 = inlined_call_operand.hbm [shape: f32[8,256], index: 7, kind: output, shape index: {}]
  %s8 = sld [smem:[#allocation0]]
  $region38: #{tpu_custom_call.1} parent=0
    _
  %s10 = ssub.s32 1, %s8
  %s11 = scalar_select 0, %s10, %s8
  $region1: #{tpu_custom_call.1} parent=0
    #allocation2 [shape = 'u8[8192]{0}', space=vmem, size = 0x2000, scoped, tag = 'output window, operand 0, single buffered']
    #allocation3 [shape = 's32[1]{0}', space=sflag, size = 0x4, scoped, tag = 'scoped memory for tpu_custom_call.1']
    %12 = vsyncpa [#allocation3], 0
    // Predicated region
    $region2: #{tpu_custom_call.1} parent=1 // pred_check
      _
    $region3: #{tpu_custom_call.1} parent=1 // pred_check_branch
      %14 = sbr.rel (0) target = $region5
    $region4: #{tpu_custom_call.1} parent=1 // pred_region
      _
    $region5: #{tpu_custom_call.1} parent=1 // pred_fallthru
      _
    // Predicated region
    $region6: #{tpu_custom_call.1} parent=1 // pred_check
      _
    $region7: #{tpu_custom_call.1} parent=1 // pred_check_branch
      %16 = sbr.rel (0) target = $region9
    $region8: #{tpu_custom_call.1} parent=1 // pred_region
      _
    $region9: #{tpu_custom_call.1} parent=1 // pred_fallthru
      _
    // Predicated region
    $region10: #{tpu_custom_call.1} parent=1 // pred_check
      _
    $region11: #{tpu_custom_call.1} parent=1 // pred_check_branch
      %18 = sbr.rel (0) target = $region13
    $region12: #{tpu_custom_call.1} parent=1 // pred_region
      _
    $region13: #{tpu_custom_call.1} parent=1 // pred_fallthru
      _
    // Predicated region
    $region14: #{tpu_custom_call.1} parent=1 // pred_check
      _
    $region15: #{tpu_custom_call.1} parent=1 // pred_check_branch
      %20 = sbr.rel (0) target = $region17
    $region16: #{tpu_custom_call.1} parent=1 // pred_region
      _
    $region17: #{tpu_custom_call.1} parent=1 // pred_fallthru
      _
    // Predicated region
    $region18: #{tpu_custom_call.1} parent=1 // pred_check
      _
    $region19: #{tpu_custom_call.1} parent=1 // pred_check_branch
      %22 = sbr.rel (0) target = $region21
    $region20: #{tpu_custom_call.1} parent=1 // pred_region
      _
    $region21: #{tpu_custom_call.1} parent=1 // pred_fallthru
      _
    // Predicated region
    $region22: #{tpu_custom_call.1} parent=1 // pred_check
      _
    $region23: #{tpu_custom_call.1} parent=1 // pred_check_branch
      %24 = sbr.rel (0) target = $region25
    $region24: #{tpu_custom_call.1} parent=1 // pred_region
      _
    $region25: #{tpu_custom_call.1} parent=1 // pred_fallthru
      _
    // Predicated region
    $region26: #{tpu_custom_call.1} parent=1 // pred_check
      _
    $region27: #{tpu_custom_call.1} parent=1 // pred_check_branch
      %26 = sbr.rel (0) target = $region29
    $region28: #{tpu_custom_call.1} parent=1 // pred_region
      _
    $region29: #{tpu_custom_call.1} parent=1 // pred_fallthru
      _
    %v27 = vld [vmem:[%s1] sm:$0xff]
    %v28 = vld [vmem:[%s3] sm:$0xff]
    %v29 = vld [vmem:[%s3 + $0x8] sm:$0xff]
    %v30 = vld [vmem:[%s3 + $0x10] sm:$0xff]
    %v31 = vld [vmem:[%s3 + $0x18] sm:$0xff]
    %v32 = vld [vmem:[%s3 + $0x20] sm:$0xff]
    %v33 = vld [vmem:[%s3 + $0x28] sm:$0xff]
    %v34 = vld [vmem:[%s3 + $0x30] sm:$0xff]
    %v35 = vld [vmem:[%s3 + $0x38] sm:$0xff]
    %v36 = vld [vmem:[%s4] sm:$0x1]
    %v38 = vperm.slane %v36, 0
    %vm40 = vcmask 523264
    %v42 = vsel %vm40, %v27, 0
    %44 = vmatpush.msra.mxu0 0.0
    %45 = vmatpush.msra.mxu0 0.0
    %46 = vmatpush.msra.mxu0 0.0
    %47 = vmatpush.msra.mxu0 0.0
    %48 = vmatpush.msra.mxu0 0.0
    %49 = vmatpush.msra.mxu0 0.0
    %50 = vmatpush.msra.mxu0 0.0
    %51 = vmatpush.msra.mxu0 0.0
    %52 = vmatpush.msra.mxu0 %v35
    %53 = vmatpush.msra.mxu0 %v34
    %54 = vmatpush.msra.mxu0 %v33
    %55 = vmatpush.msra.mxu0 %v32
    %56 = vmatpush.msra.mxu0 %v31
    %57 = vmatpush.msra.mxu0 %v30
    %58 = vmatpush.msra.mxu0 %v29
    %59 = vmatpush.msra.mxu0 %v28
    %60 = vmatmul.f32.gmra.mxu0 %v42
    %v61 = vpop.f32.mrf.mxu0
    %v62 = vadd.f32 %v38, %v61
    %63 = vdwg.mxu0
    %v64 = vmax.f32 %v62, 0.0
    %v65 = vld [vmem:[%s5] sm:$0xff]
    %v66 = vld [vmem:[%s6] sm:$0x3]
    %v68 = vperm.slane %v66, 0
    %v69 = vperm.slane %v66, 1
    %73 = vst [vmem:[#allocation1] ss:$2 sm:$0xff] %v65
    %v74 = vld.sshfl [vmem:[#allocation1] sm:$0xff pattern:$0x75316420]
    %v75 = vld.sshfl [vmem:[#allocation1 + $0x8] sm:$0xff pattern:$0x75316420]
    %vm76 = vcmask 31744
    %v78 = vsel %vm76, %v64, 0
    %vm80 = vcmask 1043456
    %v81 = vsel %vm80, %v74, 0
    %v83 = vsel %vm80, %v75, 0
    %85 = vmatpush.msra.mxu0 0.0
    %86 = vmatpush.msra.mxu0 0.0
    %87 = vmatpush.msra.mxu0 0.0
    %88 = vmatpush.msra.mxu0 0.0
    %89 = vmatpush.msra.mxu0 0.0
    %90 = vmatpush.msra.mxu0 0.0
    %91 = vmatpush.msra.mxu0 0.0
    %92 = vmatpush.msra.mxu0 0.0
    %93 = vmatpush.msra.mxu0 0.0
    %94 = vmatpush.msra.mxu0 0.0
    %95 = vmatpush.msra.mxu0 0.0
    %96 = vmatpush.msra.mxu0 0.0
    %97 = vmatpush.msra.mxu0 0.0
    %98 = vmatpush.msra.mxu0 0.0
    %99 = vmatpush.msra.mxu0 0.0
    %100 = vmatpush.msra.mxu0 %v81
    %101 = vmatmul.f32.gmra.mxu0 %v78
    %v102 = vpop.f32.mrf.mxu0
    %v103 = vadd.f32 %v68, %v102
    %104 = vdwg.mxu0
    %105 = vmatpush.msra.mxu0 0.0
    %106 = vmatpush.msra.mxu0 0.0
    %107 = vmatpush.msra.mxu0 0.0
    %108 = vmatpush.msra.mxu0 0.0
    %109 = vmatpush.msra.mxu0 0.0
    %110 = vmatpush.msra.mxu0 0.0
    %111 = vmatpush.msra.mxu0 0.0
    %112 = vmatpush.msra.mxu0 0.0
    %113 = vmatpush.msra.mxu0 0.0
    %114 = vmatpush.msra.mxu0 0.0
    %115 = vmatpush.msra.mxu0 0.0
    %116 = vmatpush.msra.mxu0 0.0
    %117 = vmatpush.msra.mxu0 0.0
    %118 = vmatpush.msra.mxu0 0.0
    %119 = vmatpush.msra.mxu0 0.0
    %120 = vmatpush.msra.mxu0 %v83
    %121 = vmatmul.f32.gmra.mxu0 %v78
    %v122 = vpop.f32.mrf.mxu0
    %v123 = vadd.f32 %v69, %v122
    %124 = vdwg.mxu0
    %v125 = vld [vmem:[%s0] sm:$0xff]
    %v126 = vlaneseq
    %v127 = vand.u32 %v126, 127
    %128 = vset.pattern.permute.xlu0 0
    %129 = vperm.xlu0 %128, %v125
    %v130 = vpop.permute.xlu0 %129
    %vm131 = vcmp.eq.s32.totalorder %v130, %v127
    %v132 = vsel %vm131, 1, 0
    %v133 = vcvt.s32.f32 %v132
    %v134 = vld [vmem:[%s2] sm:$0xff]
    %v135 = vld [vmem:[%s2 + $0x8] sm:$0xff]
    %vm136 = vcmask 64512
    %v138 = vsel %vm136, %v133, 0
    %140 = vmatpush.msra.mxu0 0.0
    %141 = vmatpush.msra.mxu0 0.0
    %142 = vmatpush.msra.mxu0 0.0
    %143 = vmatpush.msra.mxu0 0.0
    %144 = vmatpush.msra.mxu0 0.0
    %145 = vmatpush.msra.mxu0 0.0
    %146 = vmatpush.msra.mxu0 0.0
    %147 = vmatpush.msra.mxu0 0.0
    %148 = vmatpush.msra.mxu0 0.0
    %149 = vmatpush.msra.mxu0 0.0
    %150 = vmatpush.msra.mxu0 0.0
    %151 = vmatpush.msra.mxu0 0.0
    %152 = vmatpush.msra.mxu0 0.0
    %153 = vmatpush.msra.mxu0 0.0
    %154 = vmatpush.msra.mxu0 0.0
    %155 = vmatpush.msra.mxu0 %v134
    %156 = vmatmul.f32.gmra.mxu0 %v138
    %v157 = vpop.f32.mrf.mxu0
    %v158 = vadd.f32 %v103, %v157
    %159 = vdwg.mxu0
    %160 = vmatpush.msra.mxu0 0.0
    %161 = vmatpush.msra.mxu0 0.0
    %162 = vmatpush.msra.mxu0 0.0
    %163 = vmatpush.msra.mxu0 0.0
    %164 = vmatpush.msra.mxu0 0.0
    %165 = vmatpush.msra.mxu0 0.0
    %166 = vmatpush.msra.mxu0 0.0
    %167 = vmatpush.msra.mxu0 0.0
    %168 = vmatpush.msra.mxu0 0.0
    %169 = vmatpush.msra.mxu0 0.0
    %170 = vmatpush.msra.mxu0 0.0
    %171 = vmatpush.msra.mxu0 0.0
    %172 = vmatpush.msra.mxu0 0.0
    %173 = vmatpush.msra.mxu0 0.0
    %174 = vmatpush.msra.mxu0 0.0
    %175 = vmatpush.msra.mxu0 %v135
    %176 = vmatmul.f32.gmra.mxu0 %v138
    %v177 = vpop.f32.mrf.mxu0
    %v178 = vadd.f32 %v123, %v177
    %179 = vdwg.mxu0
    %180 = vst [vmem:[#allocation2] sm:$0xff] %v158
    %181 = vst [vmem:[#allocation2 + $0x8] sm:$0xff] %v178
    // Predicated region
    $region30: #{tpu_custom_call.1} parent=1 // pred_check
      _
    $region31: #{tpu_custom_call.1} parent=1 // pred_check_branch
      %183 = sbr.rel (0) target = $region33
    $region32: #{tpu_custom_call.1} parent=1 // pred_region
      %185 = vsyncadd [#allocation3], 0
      %s187 = sshll.u32 [#allocation2], 4
      %s188 = int_to_ptr.vmem [resolvable:$true] %s187
      %s189 = sshll.u32 %s7, 4
      %s190 = int_to_ptr.hbm [resolvable:$true] %s189
      %192 = dma.vmem_to_hbm [thread:$0]  %s188, 256, %s190, [#allocation3]
    $region33: #{tpu_custom_call.1} parent=1 // pred_fallthru
      _
    // Predicated region
    $region34: #{tpu_custom_call.1} parent=1 // pred_check
      _
    $region35: #{tpu_custom_call.1} parent=1 // pred_check_branch
      %194 = sbr.rel (0) target = $region37
    $region36: #{tpu_custom_call.1} parent=1 // pred_region
      %196 = dma.done [#allocation3], 256
    $region37: #{tpu_custom_call.1} parent=1 // pred_fallthru
      _
    %197 = vsyncpa [#allocation3], 1

</llo_original>
